<compile_context>
chip_gen: v7x
topology: tpu7x:2x2x1
jax: 0.10.0
libtpu: 0.0.40
codegen_flags: <defaults>
</compile_context>

<pallas_src>
import functools

import jax
import jax.numpy as jnp
from jax import lax
from jax.experimental import pallas as pl
from jax.experimental.pallas import tpu as pltpu
import numpy as np


def _round_up(x, m):
    return (x + m - 1) // m * m


def _make_kernel(wp: int, tap_len: int):
    """Per-(image, row-tile) fused kernel.

    Refs:
      x_ref  : (1, 1, Cin, PE)   compute_dtype  zero-padded flattened slab
      k0_ref : (Mtot, Cin)       compute_dtype  stacked branch 1x1 weights
      b0_ref : (Mtot, 1)         f32            stacked branch 1x1 biases
      k1_ref : (Cout, 9*Mtot)    compute_dtype  taps-major fused 3x3 weights
      b1_ref : (Cout, 1)         f32            summed 3x3 biases
      a_ref  : (Cout, 1)         f32            PReLU slope (1.0 => identity)
      o_ref  : (1, Cout, L)      f32            activated stride-1 output
    """

    def kernel(x_ref, k0_ref, b0_ref, k1_ref, b1_ref, a_ref, o_ref):
        x = x_ref[0, 0]                                         # (Cin, PE)
        # Fused 1x1 for all branches + b0.  Border lanes of x are zero, so
        # they come out exactly as b0 (the reference's b0-filled border).
        y0 = jnp.dot(k0_ref[...], x, preferred_element_type=jnp.float32)
        y0 = (y0 + b0_ref[...]).astype(x_ref.dtype)             # (Mtot, PE)

        # The nine 3x3 taps are lane-offset views of y0; stacking them on the
        # contraction axis makes the whole fused 3x3 ONE MXU matmul.
        parts = []
        for dy in range(3):
            for dx in range(3):
                off = dy * wp + dx
                parts.append(y0[:, off:off + tap_len])          # (Mtot, L)
        ystack = jnp.concatenate(parts, axis=0)                 # (9*Mtot, L)

        out = jnp.dot(k1_ref[...], ystack,
                      preferred_element_type=jnp.float32)       # (Cout, L)
        out = out + b1_ref[...]
        a = a_ref[...]
        o_ref[0] = jnp.where(out >= 0, out, a * out)            # PReLU

    return kernel


def _fused_seqconv3x3(x_nchw, k0_big, b0_big, k1_big, b1_big, act_alpha, *,
                      stride, row_tile, compute_dtype):
    """y = PReLU_a( conv3x3_{k1,b1}( b0-bordered-pad( conv1x1_{k0,b0}(x) ) ) )
    with the branch-stacked fused weights; stride>1 via subsampling."""
    N, Cin, H, W = x_nchw.shape
    Mtot = k0_big.shape[0]
    Cout = k1_big.shape[0]
    Wp = W + 2
    itemsize = jnp.dtype(compute_dtype).itemsize

    # Pad the stacked-Mid axis to the sublane packing of compute_dtype so the
    # tap concat / MXU feed stay sublane-aligned (zero rows/columns: exact).
    sub = 8 * (4 // itemsize)
    Mp = _round_up(Mtot, sub)
    k0p = jnp.pad(k0_big.astype(jnp.float32), ((0, Mp - Mtot), (0, 0)))
    b0p = jnp.pad(b0_big.astype(jnp.float32), ((0, Mp - Mtot),))
    k1p = jnp.pad(k1_big.astype(jnp.float32),
                  ((0, 0), (0, Mp - Mtot), (0, 0), (0, 0)))

    # ---- row-tile / VMEM sizing --------------------------------------------
    if row_tile is None:
        per_row = Wp * (2 * 2 * Cin                 # double-buffered x slab
                        + (4 + itemsize) * Mp       # y0 f32 + compute-dtype copy
                        + 9 * itemsize * Mp         # tap stack
                        + 2 * 4 * Cout)             # double-buffered f32 out
        row_tile = max(1, min(H, (12 << 20) // max(per_row, 1)))
        # keep >= 4 grid steps so both v7x TensorCores / the pipeliner have work
        while N * (-(-H // row_tile)) < 4 and row_tile > 1:
            row_tile = (row_tile + 1) // 2
    th = int(row_tile)
    n_t = -(-H // th)                      # ceil(H / th) row tiles
    o_max = 2 * Wp + 2                     # largest tap offset (dy=2, dx=2)
    L = _round_up(th * Wp, 128)            # output lane width (lane-aligned)
    PE = _round_up(L + o_max, 128)         # extended slab width (lane-aligned)
    S = (th + 2) * Wp                      # real (halo-included) slab width

    step_bytes = (2 * Cin * PE * itemsize
                  + Mp * PE * (4 + itemsize)
                  + 9 * Mp * L * itemsize
                  + 2 * Cout * L * 4)
    vmem_limit = int(min(56 << 20, max(24 << 20, 2 * step_bytes)))

    # ---- build the halo slabs in ONE compute-dtype pad + stack --------------
    # 1px spatial zero pad reproduces the b0 border; extra bottom pad rows give
    # every row tile its full 2-row halo even when H % th != 0.
    # TODO(synk): for very large images replace this duplication with manual
    # in-kernel DMA of the halo slab (memory_space=pl.ANY) to save one HBM
    # write+read of the input.
    x_pad = jnp.pad(x_nchw.astype(compute_dtype),
                    ((0, 0), (0, 0), (1, 1 + (n_t * th - H)), (1, 1)))
    x_flat = x_pad.reshape(N, Cin, (n_t * th + 2) * Wp)
    slabs = [x_flat[:, :, t * th * Wp:t * th * Wp + S] for t in range(n_t)]
    x_slabs = jnp.stack(slabs, axis=1)                       # (N, n_t, Cin, S)
    x_slabs = jnp.pad(x_slabs, ((0, 0), (0, 0), (0, 0), (0, PE - S)))

    k0_c = k0p.astype(compute_dtype)                         # (Mp, Cin)
    # taps-major fused weight tile: k1_all[c, (3*dy+dx)*Mp + m] = k1p[c,m,dy,dx]
    k1_all = jnp.transpose(k1p, (0, 2, 3, 1)).reshape(Cout, 9 * Mp)
    k1_all = k1_all.astype(compute_dtype)
    b0_2d = b0p.reshape(Mp, 1)
    b1_2d = b1_big.reshape(Cout, 1).astype(jnp.float32)
    a_2d = act_alpha.reshape(Cout, 1).astype(jnp.float32)

    out_flat = pl.pallas_call(
        _make_kernel(Wp, L),
        out_shape=jax.ShapeDtypeStruct((N, Cout, n_t * L), jnp.float32),
        grid_spec=pltpu.PrefetchScalarGridSpec(
            num_scalar_prefetch=0,
            grid=(N, n_t),
            in_specs=[
                pl.BlockSpec((1, 1, Cin, PE), lambda n, t: (n, t, 0, 0)),
                pl.BlockSpec((Mp, Cin), lambda n, t: (0, 0)),
                pl.BlockSpec((Mp, 1), lambda n, t: (0, 0)),
                pl.BlockSpec((Cout, 9 * Mp), lambda n, t: (0, 0)),
                pl.BlockSpec((Cout, 1), lambda n, t: (0, 0)),
                pl.BlockSpec((Cout, 1), lambda n, t: (0, 0)),
            ],
            out_specs=pl.BlockSpec((1, Cout, L), lambda n, t: (n, 0, t)),
        ),
        compiler_params=pltpu.CompilerParams(
            dimension_semantics=("parallel", "parallel"),
            vmem_limit_bytes=vmem_limit),
    )(x_slabs, k0_c, b0_2d, k1_all, b1_2d, a_2d)

    # Valid stride-1 outputs of tile t live at local flat index r*Wp + c with
    # r < th, c < W.  Lane-major layout => slice + reshape only, no transpose.
    out = out_flat.reshape(N, Cout, n_t, L)[:, :, :, :th * Wp]
    out = out.reshape(N, Cout, n_t, th, Wp)[:, :, :, :, :W]
    out = out.reshape(N, Cout, n_t * th, W)[:, :, :H, :]
    if stride != 1:
        # TODO(synk): subsample in-kernel before the second matmul / store to
        # save ~(1 - 1/stride^2) of the 3x3 FLOPs and the f32 output HBM write.
        out = out[:, :, ::stride, ::stride]
    return out


def build_fused_ecb_weights(p, cin, with_idt=False):
    """Stack the 5 ECB branches into one SeqConv-style parameter set:
       k0_big (Mtot,cin), b0_big (Mtot,), k1_big (cout,Mtot,3,3), b1_big (cout,)
       with Mtot = cin + mid + 3*cout."""
    cout = p['k3_w'].shape[0]
    eye_in = jnp.eye(cin, dtype=jnp.float32)
    k0_big = jnp.concatenate([eye_in,
                              p['c13_k0'].astype(jnp.float32),
                              p['sbx_k0'].astype(jnp.float32),
                              p['sby_k0'].astype(jnp.float32),
                              p['lpl_k0'].astype(jnp.float32)], axis=0)
    b0_big = jnp.concatenate([jnp.zeros((cin,), jnp.float32),
                              p['c13_b0'], p['sbx_b0'], p['sby_b0'],
                              p['lpl_b0']], axis=0).astype(jnp.float32)

    def grouped(scale, mask):   # per-channel 3x3 as a diagonal (cout,cout,3,3) block
        return (jnp.eye(cout, dtype=jnp.float32)[:, :, None, None]
                * (scale[:, None, None] * mask)[:, None, :, :])

    k1_big = jnp.concatenate([p['k3_w'].astype(jnp.float32),
                              p['c13_k1'].astype(jnp.float32),
                              grouped(p['sbx_scale'], p['sbx_mask']),
                              grouped(p['sby_scale'], p['sby_mask']),
                              grouped(p['lpl_scale'], p['lpl_mask'])], axis=1)
    if with_idt:
        # identity skip == +1 on the center tap of the identity-1x1 block
        center = jnp.zeros((3, 3), jnp.float32).at[1, 1].set(1.0)
        idt = jnp.eye(cout, cin, dtype=jnp.float32)[:, :, None, None] * center[None, None]
        k1_big = k1_big.at[:, :cin].add(idt)
    b1_big = (p['k3_b'] + p['c13_b1'] + p['sbx_bias'] + p['sby_bias']
              + p['lpl_bias']).astype(jnp.float32)
    return k0_big, b0_big, k1_big, b1_big


@functools.partial(jax.jit, static_argnames=("stride", "row_tile", "compute_dtype"))
def seqconv3x3_pallas(x, k0, b0, k1, b1, stride=1, row_tile=None,
                      compute_dtype=jnp.bfloat16):
    """Single SeqConv3x3 branch ('conv1x1-conv3x3' or a densified grouped
    variant); linear activation (PReLU slope 1.0 == identity)."""
    cout = k1.shape[0]
    return _fused_seqconv3x3(x, k0, b0, k1, b1, jnp.ones((cout,), jnp.float32),
                             stride=stride, row_tile=row_tile,
                             compute_dtype=compute_dtype)


@functools.partial(jax.jit,
                   static_argnames=("stride", "with_idt", "row_tile", "compute_dtype"))
def ecb_forward_pallas(x, p, stride=1, with_idt=False, row_tile=None,
                       compute_dtype=jnp.bfloat16):
    """ECB training-mode forward (sum of 5 branches + PReLU) as ONE fused
    Pallas call.  'relu' == slope 0, 'linear' == slope 1 via p['prelu']."""
    cin = x.shape[1]
    k0b, b0b, k1b, b1b = build_fused_ecb_weights(p, cin, with_idt=with_idt)
    return _fused_seqconv3x3(x, k0b, b0b, k1b, b1b, p['prelu'],
                             stride=stride, row_tile=row_tile,
                             compute_dtype=compute_dtype)


# ------------------------- pure-JAX references -------------------------
def _q(a):
    """bf16 rounding that the Pallas path applies to its MXU inputs (x, k0,
    the 1x1 result, the fused 3x3 weights); mirrored in the reference so the
    f32 conv reference checks to a tight tolerance (accuracy policy, not a bug)."""
    return a.astype(jnp.bfloat16).astype(jnp.float32)


def make_grouped_dense_k1(scale, mask):
    c = scale.shape[0]
    return (jnp.eye(c, dtype=jnp.float32)[:, :, None, None]
            * (scale[:, None, None] * mask)[:, None, :, :])


def seqconv3x3_ref(x, k0, b0, k1, b1, stride=1):
    hi = lax.Precision.HIGHEST
    y0 = jnp.einsum('nchw,mc->nmhw', _q(x), _q(k0), precision=hi)
    y0 = y0 + b0[None, :, None, None]
    y0 = jnp.pad(y0, ((0, 0), (0, 0), (1, 1), (1, 1)))
    b0v = b0[None, :, None, None]
    y0 = y0.at[:, :, 0:1, :].set(b0v)
    y0 = y0.at[:, :, -1:, :].set(b0v)
    y0 = y0.at[:, :, :, 0:1].set(b0v)
    y0 = y0.at[:, :, :, -1:].set(b0v)
    y0 = _q(y0)
    y1 = lax.conv_general_dilated(
        y0, _q(k1), (stride, stride), 'VALID',
        dimension_numbers=('NCHW', 'OIHW', 'NCHW'), precision=hi)
    return y1 + b1[None, :, None, None]


def ecb_ref(x, p, stride=1):
    cin = x.shape[1]
    eye = jnp.eye(cin, dtype=jnp.float32)
    zeros = jnp.zeros((cin,), jnp.float32)
    y = seqconv3x3_ref(x, eye, zeros, p['k3_w'], p['k3_b'], stride)
    y = y + seqconv3x3_ref(x, p['c13_k0'], p['c13_b0'],
                           p['c13_k1'], p['c13_b1'], stride)
    y = y + seqconv3x3_ref(x, p['sbx_k0'], p['sbx_b0'],
                           make_grouped_dense_k1(p['sbx_scale'], p['sbx_mask']),
                           p['sbx_bias'], stride)
    y = y + seqconv3x3_ref(x, p['sby_k0'], p['sby_b0'],
                           make_grouped_dense_k1(p['sby_scale'], p['sby_mask']),
                           p['sby_bias'], stride)
    y = y + seqconv3x3_ref(x, p['lpl_k0'], p['lpl_b0'],
                           make_grouped_dense_k1(p['lpl_scale'], p['lpl_mask']),
                           p['lpl_bias'], stride)
    a = p['prelu'][None, :, None, None]
    return jnp.where(y >= 0, y, a * y)


def sobel_x_mask(c):
    m = np.zeros((c, 3, 3), np.float32)
    m[:, 0, 0] = 1.0; m[:, 1, 0] = 2.0; m[:, 2, 0] = 1.0
    m[:, 0, 2] = -1.0; m[:, 1, 2] = -2.0; m[:, 2, 2] = -1.0
    return jnp.asarray(m)


def sobel_y_mask(c):
    m = np.zeros((c, 3, 3), np.float32)
    m[:, 0, 0] = 1.0; m[:, 0, 1] = 2.0; m[:, 0, 2] = 1.0
    m[:, 2, 0] = -1.0; m[:, 2, 1] = -2.0; m[:, 2, 2] = -1.0
    return jnp.asarray(m)


def laplacian_mask(c):
    m = np.zeros((c, 3, 3), np.float32)
    m[:, 0, 1] = 1.0; m[:, 1, 0] = 1.0; m[:, 1, 2] = 1.0
    m[:, 2, 1] = 1.0; m[:, 1, 1] = -4.0
    return jnp.asarray(m)


if __name__ == "__main__":
    key = jax.random.PRNGKey(0)
    N, Cin, H, W = 2, 4, 16, 16
    Cout, depth_multiplier, stride = 4, 2, 1
    Mid = int(Cout * depth_multiplier)

    keys = jax.random.split(key, 24)
    x = jax.random.normal(keys[0], (N, Cin, H, W), jnp.float32)

    # ------------- SeqConv3x3 'conv1x1-conv3x3' (stride 1, row-tiled) -------
    k0 = jax.random.normal(keys[1], (Mid, Cin)) * 0.1
    b0 = jax.random.normal(keys[2], (Mid,)) * 0.1
    k1 = jax.random.normal(keys[3], (Cout, Mid, 3, 3)) * 0.1
    b1 = jax.random.normal(keys[4], (Cout,)) * 0.1

    out_a = jax.block_until_ready(
        seqconv3x3_pallas(x, k0, b0, k1, b1, stride=1, row_tile=8))
    ref_a = seqconv3x3_ref(x, k0, b0, k1, b1, 1)
    np.testing.assert_allclose(np.asarray(out_a), np.asarray(ref_a),
                               atol=2e-3, rtol=2e-3)

    # ------------- same weights, stride 2 (subsample of stride-1) -----------
    out_s2 = jax.block_until_ready(seqconv3x3_pallas(x, k0, b0, k1, b1, stride=2))
    ref_s2 = seqconv3x3_ref(x, k0, b0, k1, b1, 2)
    np.testing.assert_allclose(np.asarray(out_s2), np.asarray(ref_s2),
                               atol=2e-3, rtol=2e-3)

    # ------------- full fused ECB forward (training path, PReLU) ------------
    p = {
        'k3_w': jax.random.normal(keys[5], (Cout, Cin, 3, 3)) * 0.1,
        'k3_b': jax.random.normal(keys[6], (Cout,)) * 0.1,
        'c13_k0': jax.random.normal(keys[7], (Mid, Cin)) * 0.1,
        'c13_b0': jax.random.normal(keys[8], (Mid,)) * 0.1,
        'c13_k1': jax.random.normal(keys[9], (Cout, Mid, 3, 3)) * 0.1,
        'c13_b1': jax.random.normal(keys[10], (Cout,)) * 0.1,
        'sbx_k0': jax.random.normal(keys[11], (Cout, Cin)) * 0.1,
        'sbx_b0': jax.random.normal(keys[12], (Cout,)) * 0.1,
        'sbx_scale': jax.random.normal(keys[13], (Cout,)) * 0.001,
        'sbx_bias': jax.random.normal(keys[14], (Cout,)) * 0.001,
        'sbx_mask': sobel_x_mask(Cout),
        'sby_k0': jax.random.normal(keys[15], (Cout, Cin)) * 0.1,
        'sby_b0': jax.random.normal(keys[16], (Cout,)) * 0.1,
        'sby_scale': jax.random.normal(keys[17], (Cout,)) * 0.001,
        'sby_bias': jax.random.normal(keys[18], (Cout,)) * 0.001,
        'sby_mask': sobel_y_mask(Cout),
        'lpl_k0': jax.random.normal(keys[19], (Cout, Cin)) * 0.1,
        'lpl_b0': jax.random.normal(keys[20], (Cout,)) * 0.1,
        'lpl_scale': jax.random.normal(keys[21], (Cout,)) * 0.001,
        'lpl_bias': jax.random.normal(keys[22], (Cout,)) * 0.001,
        'lpl_mask': laplacian_mask(Cout),
        'prelu': jnp.full((Cout,), 0.25, jnp.float32),
    }
    out_ecb = jax.block_until_ready(ecb_forward_pallas(x, p, stride=stride))
    ref_ecb = ecb_ref(x, p, stride=stride)
    np.testing.assert_allclose(np.asarray(out_ecb), np.asarray(ref_ecb),
                               atol=2e-3, rtol=2e-3)

    print("KERNEL_OK")
</pallas_src>

<mosaic_0001>
module attributes {stable_mosaic.version = 11 : i64} {
  func.func @kernel(%arg0: i32, %arg1: i32, %arg2: memref<1x1x4x384xbf16, #tpu.memory_space<vmem>>, %arg3: memref<16x4xbf16, #tpu.memory_space<vmem>>, %arg4: memref<16x1xf32, #tpu.memory_space<vmem>>, %arg5: memref<4x144xbf16, #tpu.memory_space<vmem>>, %arg6: memref<4x1xf32, #tpu.memory_space<vmem>>, %arg7: memref<4x1xf32, #tpu.memory_space<vmem>>, %arg8: memref<1x4x256xf32, #tpu.memory_space<vmem>>) attributes {dimension_semantics = [#tpu.dimension_semantics<parallel>, #tpu.dimension_semantics<parallel>], iteration_bounds = array<i64: 2, 2>, scalar_prefetch = 0 : i64, scratch_operands = 0 : i64, tpu.core_type = #tpu.core_type<tc>, window_params = [{transform_indices = @transform_0, window_bounds = array<i64: 1, 1, 4, 384>}, {pipeline_mode = #tpu.pipeline_mode<synchronous>, transform_indices = @transform_1, window_bounds = array<i64: 16, 4>}, {pipeline_mode = #tpu.pipeline_mode<synchronous>, transform_indices = @transform_2, window_bounds = array<i64: 16, 1>}, {pipeline_mode = #tpu.pipeline_mode<synchronous>, transform_indices = @transform_3, window_bounds = array<i64: 4, 144>}, {pipeline_mode = #tpu.pipeline_mode<synchronous>, transform_indices = @transform_4, window_bounds = array<i64: 4, 1>}, {pipeline_mode = #tpu.pipeline_mode<synchronous>, transform_indices = @transform_5, window_bounds = array<i64: 4, 1>}, {transform_indices = @transform_6, window_bounds = array<i64: 1, 4, 256>}]} {
    %c0 = arith.constant 0 : index
    %c0_0 = arith.constant 0 : index
    %c0_1 = arith.constant 0 : index
    %c0_2 = arith.constant 0 : index
    %0 = vector.load %arg2[%c0, %c0_0, %c0_1, %c0_2] : memref<1x1x4x384xbf16, #tpu.memory_space<vmem>>, vector<1x1x4x384xbf16>
    %1 = vector.shape_cast %0 : vector<1x1x4x384xbf16> to vector<4x384xbf16>
    %c0_3 = arith.constant 0 : index
    %c0_4 = arith.constant 0 : index
    %2 = vector.load %arg3[%c0_3, %c0_4] : memref<16x4xbf16, #tpu.memory_space<vmem>>, vector<16x4xbf16>
    %cst = arith.constant dense<0.000000e+00> : vector<16x384xf32>
    %3 = tpu.matmul %2, %1, %cst {dimension_numbers = #tpu.dot_dimension_numbers<[1], [0], [0], [1], [0, 0, 1, 1], [], []>} : vector<16x4xbf16>, vector<4x384xbf16>, vector<16x384xf32> -> vector<16x384xf32>
    %c0_5 = arith.constant 0 : index
    %c0_6 = arith.constant 0 : index
    %4 = vector.load %arg4[%c0_5, %c0_6] : memref<16x1xf32, #tpu.memory_space<vmem>>, vector<16x1xf32>
    %5 = vector.broadcast %4 : vector<16x1xf32> to vector<16x384xf32>
    %6 = arith.addf %3, %5 : vector<16x384xf32>
    %7 = arith.truncf %6 : vector<16x384xf32> to vector<16x384xbf16>
    %8 = vector.extract_strided_slice %7 {offsets = [0, 0], sizes = [16, 256], strides = [1, 1]} : vector<16x384xbf16> to vector<16x256xbf16>
    %9 = vector.extract_strided_slice %7 {offsets = [0, 1], sizes = [16, 256], strides = [1, 1]} : vector<16x384xbf16> to vector<16x256xbf16>
    %10 = vector.extract_strided_slice %7 {offsets = [0, 2], sizes = [16, 256], strides = [1, 1]} : vector<16x384xbf16> to vector<16x256xbf16>
    %11 = vector.extract_strided_slice %7 {offsets = [0, 18], sizes = [16, 256], strides = [1, 1]} : vector<16x384xbf16> to vector<16x256xbf16>
    %12 = vector.extract_strided_slice %7 {offsets = [0, 19], sizes = [16, 256], strides = [1, 1]} : vector<16x384xbf16> to vector<16x256xbf16>
    %13 = vector.extract_strided_slice %7 {offsets = [0, 20], sizes = [16, 256], strides = [1, 1]} : vector<16x384xbf16> to vector<16x256xbf16>
    %14 = vector.extract_strided_slice %7 {offsets = [0, 36], sizes = [16, 256], strides = [1, 1]} : vector<16x384xbf16> to vector<16x256xbf16>
    %15 = vector.extract_strided_slice %7 {offsets = [0, 37], sizes = [16, 256], strides = [1, 1]} : vector<16x384xbf16> to vector<16x256xbf16>
    %16 = vector.extract_strided_slice %7 {offsets = [0, 38], sizes = [16, 256], strides = [1, 1]} : vector<16x384xbf16> to vector<16x256xbf16>
    %17 = tpu.concatenate %8, %9, %10, %11, %12, %13, %14, %15, %16 in 0 : vector<16x256xbf16>, vector<16x256xbf16>, vector<16x256xbf16>, vector<16x256xbf16>, vector<16x256xbf16>, vector<16x256xbf16>, vector<16x256xbf16>, vector<16x256xbf16>, vector<16x256xbf16> -> vector<144x256xbf16>
    %c0_7 = arith.constant 0 : index
    %c0_8 = arith.constant 0 : index
    %18 = vector.load %arg5[%c0_7, %c0_8] : memref<4x144xbf16, #tpu.memory_space<vmem>>, vector<4x144xbf16>
    %cst_9 = arith.constant dense<0.000000e+00> : vector<4x256xf32>
    %19 = tpu.matmul %18, %17, %cst_9 {dimension_numbers = #tpu.dot_dimension_numbers<[1], [0], [0], [1], [0, 0, 1, 1], [], []>} : vector<4x144xbf16>, vector<144x256xbf16>, vector<4x256xf32> -> vector<4x256xf32>
    %c0_10 = arith.constant 0 : index
    %c0_11 = arith.constant 0 : index
    %20 = vector.load %arg6[%c0_10, %c0_11] : memref<4x1xf32, #tpu.memory_space<vmem>>, vector<4x1xf32>
    %21 = vector.broadcast %20 : vector<4x1xf32> to vector<4x256xf32>
    %22 = arith.addf %19, %21 : vector<4x256xf32>
    %c0_12 = arith.constant 0 : index
    %c0_13 = arith.constant 0 : index
    %23 = vector.load %arg7[%c0_12, %c0_13] : memref<4x1xf32, #tpu.memory_space<vmem>>, vector<4x1xf32>
    %cst_14 = arith.constant 0.000000e+00 : f32
    %24 = vector.broadcast %cst_14 : f32 to vector<4x256xf32>
    %25 = arith.cmpf oge, %22, %24 : vector<4x256xf32>
    %26 = vector.broadcast %23 : vector<4x1xf32> to vector<4x256xf32>
    %27 = arith.mulf %26, %22 : vector<4x256xf32>
    %28 = arith.select %25, %22, %27 : vector<4x256xi1>, vector<4x256xf32>
    %c0_15 = arith.constant 0 : index
    %c0_16 = arith.constant 0 : index
    %c0_17 = arith.constant 0 : index
    %29 = vector.load %arg8[%c0_15, %c0_16, %c0_17] : memref<1x4x256xf32, #tpu.memory_space<vmem>>, vector<1x4x256xf32>
    %30 = vector.shape_cast %29 : vector<1x4x256xf32> to vector<4x256xf32>
    %31 = vector.shape_cast %28 : vector<4x256xf32> to vector<1x4x256xf32>
    tpu.vector_store %arg8[%c0_15, %c0_16, %c0_17], %31 {strides = array<i32>} : memref<1x4x256xf32, #tpu.memory_space<vmem>>, vector<1x4x256xf32>,
    return
  }
  func.func @transform_0(%arg0: i32, %arg1: i32) -> (i32, i32, i32, i32) {
    %c0_i32 = arith.constant 0 : i32
    %c0_i32_0 = arith.constant 0 : i32
    %c0_i32_1 = arith.constant 0 : i32
    return %arg0, %arg1, %c0_i32, %c0_i32_0 : i32, i32, i32, i32
  }
  func.func @transform_1(%arg0: i32, %arg1: i32) -> (i32, i32) {
    %c0_i32 = arith.constant 0 : i32
    %c0_i32_0 = arith.constant 0 : i32
    %c0_i32_1 = arith.constant 0 : i32
    return %c0_i32, %c0_i32_0 : i32, i32
  }
  func.func @transform_2(%arg0: i32, %arg1: i32) -> (i32, i32) {
    %c0_i32 = arith.constant 0 : i32
    %c0_i32_0 = arith.constant 0 : i32
    %c0_i32_1 = arith.constant 0 : i32
    return %c0_i32, %c0_i32_0 : i32, i32
  }
  func.func @transform_3(%arg0: i32, %arg1: i32) -> (i32, i32) {
    %c0_i32 = arith.constant 0 : i32
    %c0_i32_0 = arith.constant 0 : i32
    %c0_i32_1 = arith.constant 0 : i32
    return %c0_i32, %c0_i32_0 : i32, i32
  }
  func.func @transform_4(%arg0: i32, %arg1: i32) -> (i32, i32) {
    %c0_i32 = arith.constant 0 : i32
    %c0_i32_0 = arith.constant 0 : i32
    %c0_i32_1 = arith.constant 0 : i32
    return %c0_i32, %c0_i32_0 : i32, i32
  }
  func.func @transform_5(%arg0: i32, %arg1: i32) -> (i32, i32) {
    %c0_i32 = arith.constant 0 : i32
    %c0_i32_0 = arith.constant 0 : i32
    %c0_i32_1 = arith.constant 0 : i32
    return %c0_i32, %c0_i32_0 : i32, i32
  }
  func.func @transform_6(%arg0: i32, %arg1: i32) -> (i32, i32, i32) {
    %c0_i32 = arith.constant 0 : i32
    %c0_i32_0 = arith.constant 0 : i32
    return %arg0, %c0_i32, %arg1 : i32, i32, i32
  }
}

</mosaic_0001>

<llo_original>
// kernel: seqconv3x3_pallas.1
$region0: #{seqconv3x3_pallas.1}
  #allocation0 [shape = 'u32[]', space=smem, size = 0x4, offset = 0x4, fixed_abs, tag = 'smem constant byte address 0x4 - core index']
  #allocation1 [shape = 'u32[144,128]{1,0:T(1,128)}', space=vmem, size = 0x12000, scoped, tag = 'internal scratch']
  %s0 = inlined_call_operand.vmem [shape: bf16[2,2,4,384], index: 0, kind: input, shape index: {}]
  %s1 = inlined_call_operand.vmem [shape: bf16[16,4], index: 1, kind: input, shape index: {}]
  %s2 = inlined_call_operand.vmem [shape: f32[16,1], index: 2, kind: input, shape index: {}]
  %s3 = inlined_call_operand.vmem [shape: bf16[4,144], index: 3, kind: input, shape index: {}]
  %s4 = inlined_call_operand.vmem [shape: f32[4,1], index: 4, kind: input, shape index: {}]
  %s5 = inlined_call_operand.vmem [shape: f32[4,1], index: 5, kind: input, shape index: {}]
  %s6 = inlined_call_operand.vmem [shape: f32[2,4,512], index: 6, kind: output, shape index: {}]
  %s7 = sld [smem:[#allocation0]]
  $region57: #{seqconv3x3_pallas.1} parent=0
    _
  %s9 = ssub.s32 1, %s7
  %s10 = scalar_select 0, %s9, %s7
  loop: start=0, step=1, limit=6
  $region2: #{seqconv3x3_pallas.1} parent=0 // loop_pre_header
    _
  $region3: #{seqconv3x3_pallas.1} parent=0 // loop_header
    %s12 = sphi 0, %s16
    %p13 = scmp.ge.s32.totalorder %s12, 6
    %s19 = sphi 0, %s31
    %s20 = sphi 0, %s27
    %s21 = sphi 0, %s19
    %s22 = sphi 0, %s20
    %s23 = sphi 0, %s21
    %s24 = sphi 0, %s22
    %s36 = sphi 0, %s38
    %s39 = sphi 0, %s36
    %s40 = sphi 0, %s39
    %s56 = sphi 0, %s40
    %s60 = sphi 0, %s60
    %s62 = sphi 0, %s60
    %s63 = sphi 0, %s62
    %s77 = sphi 0, %s63
    %s81 = sphi 0, %s81
    %s83 = sphi 0, %s81
    %s84 = sphi 0, %s83
    %s98 = sphi 0, %s84
    %s102 = sphi 0, %s102
    %s104 = sphi 0, %s102
    %s105 = sphi 0, %s104
    %s119 = sphi 0, %s105
    %s123 = sphi 0, %s123
    %s125 = sphi 0, %s123
    %s126 = sphi 0, %s125
    %s140 = sphi 0, %s126
    %s144 = sphi 0, %s144
    %s146 = sphi 0, %s144
    %s147 = sphi 0, %s146
    %s161 = sphi 0, %s147
    %s169 = sphi 0, %s171
    %s172 = sphi 0, %s169
    %s173 = sphi 0, %s172
    %s189 = sphi 0, %s173
  $region4: #{seqconv3x3_pallas.1} parent=0 // loop_header_branch
    %15 = sbr.rel (%p13) target = $region8
  $region5: #{seqconv3x3_pallas.1} parent=0 // loop_body
    %s17 = ssub.s32 %s12, 1
    %s18 = ssub.s32 %s12, 2
    %s25 = sadd.s32 1, %s20
    %p26 = scmp.ge.s32.totalorder %s25, 2
    %s27 = scalar_select %p26, 0, %s25
    %s28 = sadd.s32 1, %s19
    %s29 = scalar_select %p26, %s28, %s19
    %p30 = scmp.ge.s32.totalorder %s29, 2
    %s31 = scalar_select %p30, 0, %s29
    %s32 = ssub.s32 %s19, %s31
    %s33 = ssub.s32 %s20, %s27
    %s34 = sor.u32 %s32, %s33
    %p35 = scmp.eq.s32.totalorder %s34, 0
    %s37 = sadd.s32 %s36, 1
    %s38 = scalar_select %p35, %s36, %s37
    %p41 = pneg %p35
    %p42 = scmp.eq.s32.totalorder %s12, 3
    %p43 = por %p41, %p42
    %p44 = scmp.ne.s32.totalorder %s36, %s39
    %p45 = scmp.eq.s32.totalorder %s12, 0
    %p46 = por %p44, %p45
    %p47 = scmp.ne.s32.totalorder %s36, %s39
    %p48 = scmp.eq.s32.totalorder %s17, 3
    %p49 = por %p47, %p48
    %p50 = scmp.ne.s32.totalorder %s39, %s40
    %p51 = scmp.eq.s32.totalorder %s17, 0
    %p52 = por %p50, %p51
    %p53 = scmp.ne.s32.totalorder %s39, %s40
    %p54 = scmp.eq.s32.totalorder %s18, 3
    %p55 = por %p53, %p54
    %p57 = scmp.ne.s32.totalorder %s40, %s56
    %p58 = scmp.eq.s32.totalorder %s18, 0
    %p59 = por %p57, %p58
    %s61 = sadd.s32 %s60, 1
    %p64 = scmp.eq.s32.totalorder %s12, 3
    %p65 = scmp.ne.s32.totalorder %s60, %s62
    %p66 = scmp.eq.s32.totalorder %s12, 0
    %p67 = por %p65, %p66
    %p68 = scmp.ne.s32.totalorder %s60, %s62
    %p69 = scmp.eq.s32.totalorder %s17, 3
    %p70 = por %p68, %p69
    %p71 = scmp.ne.s32.totalorder %s62, %s63
    %p72 = scmp.eq.s32.totalorder %s17, 0
    %p73 = por %p71, %p72
    %p74 = scmp.ne.s32.totalorder %s62, %s63
    %p75 = scmp.eq.s32.totalorder %s18, 3
    %p76 = por %p74, %p75
    %p78 = scmp.ne.s32.totalorder %s63, %s77
    %p79 = scmp.eq.s32.totalorder %s18, 0
    %p80 = por %p78, %p79
    %s82 = sadd.s32 %s81, 1
    %p85 = scmp.eq.s32.totalorder %s12, 3
    %p86 = scmp.ne.s32.totalorder %s81, %s83
    %p87 = scmp.eq.s32.totalorder %s12, 0
    %p88 = por %p86, %p87
    %p89 = scmp.ne.s32.totalorder %s81, %s83
    %p90 = scmp.eq.s32.totalorder %s17, 3
    %p91 = por %p89, %p90
    %p92 = scmp.ne.s32.totalorder %s83, %s84
    %p93 = scmp.eq.s32.totalorder %s17, 0
    %p94 = por %p92, %p93
    %p95 = scmp.ne.s32.totalorder %s83, %s84
    %p96 = scmp.eq.s32.totalorder %s18, 3
    %p97 = por %p95, %p96
    %p99 = scmp.ne.s32.totalorder %s84, %s98
    %p100 = scmp.eq.s32.totalorder %s18, 0
    %p101 = por %p99, %p100
    %s103 = sadd.s32 %s102, 1
    %p106 = scmp.eq.s32.totalorder %s12, 3
    %p107 = scmp.ne.s32.totalorder %s102, %s104
    %p108 = scmp.eq.s32.totalorder %s12, 0
    %p109 = por %p107, %p108
    %p110 = scmp.ne.s32.totalorder %s102, %s104
    %p111 = scmp.eq.s32.totalorder %s17, 3
    %p112 = por %p110, %p111
    %p113 = scmp.ne.s32.totalorder %s104, %s105
    %p114 = scmp.eq.s32.totalorder %s17, 0
    %p115 = por %p113, %p114
    %p116 = scmp.ne.s32.totalorder %s104, %s105
    %p117 = scmp.eq.s32.totalorder %s18, 3
    %p118 = por %p116, %p117
    %p120 = scmp.ne.s32.totalorder %s105, %s119
    %p121 = scmp.eq.s32.totalorder %s18, 0
    %p122 = por %p120, %p121
    %s124 = sadd.s32 %s123, 1
    %p127 = scmp.eq.s32.totalorder %s12, 3
    %p128 = scmp.ne.s32.totalorder %s123, %s125
    %p129 = scmp.eq.s32.totalorder %s12, 0
    %p130 = por %p128, %p129
    %p131 = scmp.ne.s32.totalorder %s123, %s125
    %p132 = scmp.eq.s32.totalorder %s17, 3
    %p133 = por %p131, %p132
    %p134 = scmp.ne.s32.totalorder %s125, %s126
    %p135 = scmp.eq.s32.totalorder %s17, 0
    %p136 = por %p134, %p135
    %p137 = scmp.ne.s32.totalorder %s125, %s126
    %p138 = scmp.eq.s32.totalorder %s18, 3
    %p139 = por %p137, %p138
    %p141 = scmp.ne.s32.totalorder %s126, %s140
    %p142 = scmp.eq.s32.totalorder %s18, 0
    %p143 = por %p141, %p142
    %s145 = sadd.s32 %s144, 1
    %p148 = scmp.eq.s32.totalorder %s12, 3
    %p149 = scmp.ne.s32.totalorder %s144, %s146
    %p150 = scmp.eq.s32.totalorder %s12, 0
    %p151 = por %p149, %p150
    %p152 = scmp.ne.s32.totalorder %s144, %s146
    %p153 = scmp.eq.s32.totalorder %s17, 3
    %p154 = por %p152, %p153
    %p155 = scmp.ne.s32.totalorder %s146, %s147
    %p156 = scmp.eq.s32.totalorder %s17, 0
    %p157 = por %p155, %p156
    %p158 = scmp.ne.s32.totalorder %s146, %s147
    %p159 = scmp.eq.s32.totalorder %s18, 3
    %p160 = por %p158, %p159
    %p162 = scmp.ne.s32.totalorder %s147, %s161
    %p163 = scmp.eq.s32.totalorder %s18, 0
    %p164 = por %p162, %p163
    %s165 = ssub.s32 %s19, %s31
    %s166 = ssub.s32 %s20, %s27
    %s167 = sor.u32 %s165, %s166
    %p168 = scmp.eq.s32.totalorder %s167, 0
    %s170 = sadd.s32 %s169, 1
    %s171 = scalar_select %p168, %s169, %s170
    %p174 = pneg %p168
    %p175 = scmp.eq.s32.totalorder %s12, 3
    %p176 = por %p174, %p175
    %p177 = scmp.ne.s32.totalorder %s169, %s172
    %p178 = scmp.eq.s32.totalorder %s12, 0
    %p179 = por %p177, %p178
    %p180 = scmp.ne.s32.totalorder %s169, %s172
    %p181 = scmp.eq.s32.totalorder %s17, 3
    %p182 = por %p180, %p181
    %p183 = scmp.ne.s32.totalorder %s172, %s173
    %p184 = scmp.eq.s32.totalorder %s17, 0
    %p185 = por %p183, %p184
    %p186 = scmp.ne.s32.totalorder %s172, %s173
    %p187 = scmp.eq.s32.totalorder %s18, 3
    %p188 = por %p186, %p187
    %p190 = scmp.ne.s32.totalorder %s173, %s189
    %p191 = scmp.eq.s32.totalorder %s18, 0
    %p192 = por %p190, %p191
    %p193 = scmp.le.s32.totalorder 1, %s12
    %p194 = scmp.lt.s32.totalorder %s12, 5
    %p195 = pnand %p193, %p194
    %p196 = pneg %p195
    // Predicated region
    $region9: #{seqconv3x3_pallas.1} parent=5 // pred_check
      _
    $region10: #{seqconv3x3_pallas.1} parent=5 // pred_check_branch
      %198 = sbr.rel (%p195) target = $region12
    $region11: #{seqconv3x3_pallas.1} parent=5 // pred_region
      %s199 = ssub.s32 %s12, 1
      // Predicated region
      $region13: #{seqconv3x3_pallas.1} parent=11 // pred_check
        %p200 = pneg %p73
      $region14: #{seqconv3x3_pallas.1} parent=11 // pred_check_branch
        %202 = sbr.rel (%p200) target = $region16
      $region15: #{seqconv3x3_pallas.1} parent=11 // pred_region
        _
      $region16: #{seqconv3x3_pallas.1} parent=11 // pred_fallthru
        _
      // Predicated region
      $region17: #{seqconv3x3_pallas.1} parent=11 // pred_check
        %p203 = pneg %p94
      $region18: #{seqconv3x3_pallas.1} parent=11 // pred_check_branch
        %205 = sbr.rel (%p203) target = $region20
      $region19: #{seqconv3x3_pallas.1} parent=11 // pred_region
        _
      $region20: #{seqconv3x3_pallas.1} parent=11 // pred_fallthru
        _
      // Predicated region
      $region21: #{seqconv3x3_pallas.1} parent=11 // pred_check
        %p206 = pneg %p115
      $region22: #{seqconv3x3_pallas.1} parent=11 // pred_check_branch
        %208 = sbr.rel (%p206) target = $region24
      $region23: #{seqconv3x3_pallas.1} parent=11 // pred_region
        _
      $region24: #{seqconv3x3_pallas.1} parent=11 // pred_fallthru
        _
      // Predicated region
      $region25: #{seqconv3x3_pallas.1} parent=11 // pred_check
        %p209 = pneg %p136
      $region26: #{seqconv3x3_pallas.1} parent=11 // pred_check_branch
        %211 = sbr.rel (%p209) target = $region28
      $region27: #{seqconv3x3_pallas.1} parent=11 // pred_region
        _
      $region28: #{seqconv3x3_pallas.1} parent=11 // pred_fallthru
        _
      // Predicated region
      $region29: #{seqconv3x3_pallas.1} parent=11 // pred_check
        %p212 = pneg %p157
      $region30: #{seqconv3x3_pallas.1} parent=11 // pred_check_branch
        %214 = sbr.rel (%p212) target = $region32
      $region31: #{seqconv3x3_pallas.1} parent=11 // pred_region
        _
      $region32: #{seqconv3x3_pallas.1} parent=11 // pred_fallthru
        _
    $region12: #{seqconv3x3_pallas.1} parent=5 // pred_fallthru
      _
    %p215 = scmp.lt.s32.totalorder %s12, 4
    // Predicated region
    $region33: #{seqconv3x3_pallas.1} parent=5 // pred_check
      %p216 = pneg %p215
    $region34: #{seqconv3x3_pallas.1} parent=5 // pred_check_branch
      %218 = sbr.rel (%p216) target = $region36
    $region35: #{seqconv3x3_pallas.1} parent=5 // pred_region
      // Predicated region
      $region37: #{seqconv3x3_pallas.1} parent=35 // pred_check
        %p219 = pneg %p46
      $region38: #{seqconv3x3_pallas.1} parent=35 // pred_check_branch
        %221 = sbr.rel (%p219) target = $region40
      $region39: #{seqconv3x3_pallas.1} parent=35 // pred_region
        %p222 = scmp.lt.s32.totalorder %s19, 1
        %s223 = scalar_select %p222, %s19, 1
        %p224 = scmp.lt.s32.totalorder %s20, 1
        %s225 = scalar_select %p224, %s20, 1
        %s226 = smul.addr %s225, 3
        %s227 = smul.addr %s223, 6
        %s228 = sadd.s32 %s226, %s227
        %s229 = smul.addr %s228, 2
        %s230 = scalar_lea.vmem %s0, %s229
      $region40: #{seqconv3x3_pallas.1} parent=35 // pred_fallthru
        _
    $region36: #{seqconv3x3_pallas.1} parent=5 // pred_fallthru
      _
    %p231 = scmp.le.s32.totalorder 1, %s12
    %p232 = scmp.lt.s32.totalorder %s12, 5
    %p233 = pnand %p231, %p232
    %p234 = pneg %p233
    // Predicated region
    $region41: #{seqconv3x3_pallas.1} parent=5 // pred_check
      _
    $region42: #{seqconv3x3_pallas.1} parent=5 // pred_check_branch
      %236 = sbr.rel (%p233) target = $region44
    $region43: #{seqconv3x3_pallas.1} parent=5 // pred_region
      %s237 = ssub.s32 %s12, 1
      %p238 = scmp.lt.s32.totalorder %s21, 1
      %s239 = scalar_select %p238, %s21, 1
      %p240 = scmp.lt.s32.totalorder %s22, 1
      %s241 = scalar_select %p240, %s22, 1
      %s242 = smul.addr %s241, 3
      %s243 = smul.addr %s239, 6
      %s244 = sadd.s32 %s242, %s243
      %s245 = smul.addr %s244, 2
      %s246 = scalar_lea.vmem %s0, %s245
      %p247 = pneg %p52
      %p248 = pneg %p49
      %p249 = pneg %p73
      %p250 = pneg %p70
      %p251 = pneg %p94
      %p252 = pneg %p91
      %p253 = pneg %p115
      %p254 = pneg %p112
      %p255 = pneg %p136
      %p256 = pneg %p133
      %p257 = pneg %p157
      %p258 = pneg %p154
      %p259 = pneg %p185
      %p260 = pneg %p182
      %s261 = smul.u32 2, %s22
      %p262 = scmp.lt.s32.totalorder %s21, 1
      %s263 = scalar_select %p262, %s21, 1
      %p264 = scmp.lt.s32.totalorder %s261, 3
      %s265 = scalar_select %p264, %s261, 3
      %s266 = smul.addr %s263, 4
      %s267 = sadd.s32 %s265, %s266
      %s268 = smul.addr %s267, 4
      %s269 = scalar_lea.vmem %s6, %s268
      %p270 = scmp.lt.s32.totalorder %s21, 1
      %s271 = scalar_select %p270, %s21, 1
      %p272 = scmp.lt.s32.totalorder %s22, 1
      %s273 = scalar_select %p272, %s22, 1
      %s274 = smul.addr %s273, 3
      %s275 = smul.addr %s271, 6
      %s276 = sadd.s32 %s274, %s275
      %s277 = smul.addr %s276, 2
      %s278 = scalar_lea.vmem %s0, %s277
      %s279 = smul.u32 2, %s22
      %p280 = scmp.lt.s32.totalorder %s21, 1
      %s281 = scalar_select %p280, %s21, 1
      %p282 = scmp.lt.s32.totalorder %s279, 3
      %s283 = scalar_select %p282, %s279, 3
      %s284 = smul.addr %s281, 4
      %s285 = sadd.s32 %s283, %s284
      %s286 = smul.addr %s285, 4
      %s287 = scalar_lea.vmem %s6, %s286
      %s288 = smul.u32 2, %s22
      %v290 = vld [vmem:[%s278] sm:$0x3f]
      %v291 = vld [vmem:[%s1] sm:$0xf]
      %v292 = vld [vmem:[%s1 + $0x4] sm:$0xf]
      %v293 = vld [vmem:[%s2] sm:$0xff]
      %v294 = vld [vmem:[%s2 + $0x8] sm:$0xff]
      %296 = vset.pattern.permute.xlu0 0
      %297 = vperm.xlu0 %296, %v293
      %v298 = vpop.permute.xlu0 %297
      %301 = vset.pattern.permute.xlu0 0
      %302 = vperm.xlu0 %301, %v294
      %v303 = vpop.permute.xlu0 %302
      %v307 = vunpack.c.l.b16 %v291
      %v308 = vunpack.c.l.b16 %v292
      %v309 = vpack.c.b16 %v308, %v307
      %v311 = vcombine.high %v290, %v290
      %v313 = vunpack.c.l.s4 1983009808
      %v314 = vunpack.c.0.s8 %v313
      %v315 = vlaneseq
      %v316 = vshrl.u32 %v315, 7
      %v317 = vsub.s32 %v314, %v316
      %v318 = vrot.slane %v290, %v317
      %v320 = vunpack.c.l.s4 1983009808
      %v321 = vunpack.c.0.s8 %v320
      %v322 = vlaneseq
      %v323 = vshrl.u32 %v322, 7
      %v324 = vsub.s32 %v321, %v323
      %v325 = vrot.slane %v311, %v324
      %v326 = vcombine.high %v318, %v318
      %vm327 = vcmask 31744
      %v329 = vsel %vm327, %v309, 0
      %vm331 = vcmask 1041408
      %v333 = vsel %vm331, %v318, 0
      %v336 = vsel %vm331, %v326, 0
      %v339 = vsel %vm331, %v325, 0
      %341 = vmatprep.subr.bf16.mxu0 %v336
      %342 = vmatpush1.bf16.msra.mxu0 %v333
      %343 = vmatprep.subr.bf16.mxu0 0
      %344 = vmatpush1.bf16.msra.mxu0 0
      %345 = vmatprep.subr.bf16.mxu0 0
      %346 = vmatpush1.bf16.msra.mxu0 0
      %347 = vmatprep.subr.bf16.mxu0 0
      %348 = vmatpush1.bf16.msra.mxu0 0
      %349 = vmatprep.subr.bf16.mxu0 0
      %350 = vmatpush1.bf16.msra.mxu0 0
      %351 = vmatprep.subr.bf16.mxu0 0
      %352 = vmatpush1.bf16.msra.mxu0 0
      %353 = vmatprep.subr.bf16.mxu0 0
      %354 = vmatpush1.bf16.msra.mxu0 0
      %355 = vmatprep.subr.bf16.mxu0 0
      %356 = vmatpush1.bf16.msra.mxu0 0
      %357 = vmatprep.subr.bf16.mxu0 0
      %358 = vmatpush1.bf16.msra.mxu0 0
      %359 = vmatprep.subr.bf16.mxu0 0
      %360 = vmatpush1.bf16.msra.mxu0 0
      %361 = vmatprep.subr.bf16.mxu0 0
      %362 = vmatpush1.bf16.msra.mxu0 0
      %363 = vmatprep.subr.bf16.mxu0 0
      %364 = vmatpush1.bf16.msra.mxu0 0
      %365 = vmatprep.subr.bf16.mxu0 0
      %366 = vmatpush1.bf16.msra.mxu0 0
      %367 = vmatprep.subr.bf16.mxu0 0
      %368 = vmatpush1.bf16.msra.mxu0 0
      %369 = vmatprep.subr.bf16.mxu0 0
      %370 = vmatpush1.bf16.msra.mxu0 0
      %371 = vmatprep.subr.bf16.mxu0 0
      %372 = vmatpush1.bf16.msra.mxu0 0
      %373 = vmatprep.mubr.bf16.mxu0 0
      %374 = vmatmul.mubr.bf16.gmra.mrb[0].mxu0 %v329
      %v375 = vpop.f32.mrb[0].mxu0
      %v376 = vadd.f32 %v298, %v375
      %v377 = vpop.f32.mrb[0].mxu0
      %v378 = vadd.f32 %v298, %v377
      %v379 = vpop.f32.mrb[0].mxu0
      %v380 = vadd.f32 %v303, %v379
      %v381 = vpop.f32.mrb[0].mxu0
      %v382 = vadd.f32 %v303, %v381
      %383 = vdwg.mxu0
      %384 = vmatprep.subr.bf16.mxu0 0
      %385 = vmatpush1.bf16.msra.mxu0 %v339
      %386 = vmatprep.subr.bf16.mxu0 0
      %387 = vmatpush1.bf16.msra.mxu0 0
      %388 = vmatprep.subr.bf16.mxu0 0
      %389 = vmatpush1.bf16.msra.mxu0 0
      %390 = vmatprep.subr.bf16.mxu0 0
      %391 = vmatpush1.bf16.msra.mxu0 0
      %392 = vmatprep.subr.bf16.mxu0 0
      %393 = vmatpush1.bf16.msra.mxu0 0
      %394 = vmatprep.subr.bf16.mxu0 0
      %395 = vmatpush1.bf16.msra.mxu0 0
      %396 = vmatprep.subr.bf16.mxu0 0
      %397 = vmatpush1.bf16.msra.mxu0 0
      %398 = vmatprep.subr.bf16.mxu0 0
      %399 = vmatpush1.bf16.msra.mxu0 0
      %400 = vmatprep.subr.bf16.mxu0 0
      %401 = vmatpush1.bf16.msra.mxu0 0
      %402 = vmatprep.subr.bf16.mxu0 0
      %403 = vmatpush1.bf16.msra.mxu0 0
      %404 = vmatprep.subr.bf16.mxu0 0
      %405 = vmatpush1.bf16.msra.mxu0 0
      %406 = vmatprep.subr.bf16.mxu0 0
      %407 = vmatpush1.bf16.msra.mxu0 0
      %408 = vmatprep.subr.bf16.mxu0 0
      %409 = vmatpush1.bf16.msra.mxu0 0
      %410 = vmatprep.subr.bf16.mxu0 0
      %411 = vmatpush1.bf16.msra.mxu0 0
      %412 = vmatprep.subr.bf16.mxu0 0
      %413 = vmatpush1.bf16.msra.mxu0 0
      %414 = vmatprep.subr.bf16.mxu0 0
      %415 = vmatpush1.bf16.msra.mxu0 0
      %416 = vmatprep.mubr.bf16.mxu0 0
      %417 = vmatmul.mubr.bf16.gmra.mrb[0].mxu0 %v329
      %v418 = vpop.f32.mrb[0].mxu0
      %v419 = vadd.f32 %v298, %v418
      %v420 = vpop.f32.mrb[0].mxu0
      %v421 = vpop.f32.mrb[0].mxu0
      %v422 = vadd.f32 %v303, %v421
      %v423 = vpop.f32.mrb[0].mxu0
      %424 = vdwg.mxu0
      %v425 = vpack.c.bf16 %v380, %v376
      %v426 = vpack.c.bf16 %v382, %v378
      %v427 = vpack.c.bf16 %v422, %v419
      %431 = vrot.lane.b32.xlu0 %v425, 127
      %v432 = vpop.permute.xlu0 %431
      %433 = vrot.lane.b32.xlu0 %v426, 127
      %v434 = vpop.permute.xlu0 %433
      %435 = vrot.lane.b32.xlu0 %v427, 127
      %v436 = vpop.permute.xlu0 %435
      %vm437 = vcmask 1039360
      %v438 = vsel %vm437, %v432, %v434
      %v439 = vsel %vm437, %v434, %v436
      %442 = vrot.lane.b32.xlu0 %v425, 126
      %v443 = vpop.permute.xlu0 %442
      %444 = vrot.lane.b32.xlu0 %v426, 126
      %v445 = vpop.permute.xlu0 %444
      %446 = vrot.lane.b32.xlu0 %v427, 126
      %v447 = vpop.permute.xlu0 %446
      %vm448 = vcmask 1031168
      %v449 = vsel %vm448, %v443, %v445
      %v450 = vsel %vm448, %v445, %v447
      %453 = vrot.lane.b32.xlu0 %v425, 110
      %v454 = vpop.permute.xlu0 %453
      %455 = vrot.lane.b32.xlu0 %v426, 110
      %v456 = vpop.permute.xlu0 %455
      %457 = vrot.lane.b32.xlu0 %v427, 110
      %v458 = vpop.permute.xlu0 %457
      %vm459 = vcmask 900096
      %v460 = vsel %vm459, %v454, %v456
      %v461 = vsel %vm459, %v456, %v458
      %464 = vrot.lane.b32.xlu0 %v425, 109
      %v465 = vpop.permute.xlu0 %464
      %466 = vrot.lane.b32.xlu0 %v426, 109
      %v467 = vpop.permute.xlu0 %466
      %468 = vrot.lane.b32.xlu0 %v427, 109
      %v469 = vpop.permute.xlu0 %468
      %vm470 = vcmask 891904
      %v471 = vsel %vm470, %v465, %v467
      %v472 = vsel %vm470, %v467, %v469
      %475 = vrot.lane.b32.xlu0 %v425, 108
      %v476 = vpop.permute.xlu0 %475
      %477 = vrot.lane.b32.xlu0 %v426, 108
      %v478 = vpop.permute.xlu0 %477
      %479 = vrot.lane.b32.xlu0 %v427, 108
      %v480 = vpop.permute.xlu0 %479
      %vm481 = vcmask 883712
      %v482 = vsel %vm481, %v476, %v478
      %v483 = vsel %vm481, %v478, %v480
      %486 = vrot.lane.b32.xlu0 %v425, 92
      %v487 = vpop.permute.xlu0 %486
      %488 = vrot.lane.b32.xlu0 %v426, 92
      %v489 = vpop.permute.xlu0 %488
      %490 = vrot.lane.b32.xlu0 %v427, 92
      %v491 = vpop.permute.xlu0 %490
      %vm492 = vcmask 752640
      %v493 = vsel %vm492, %v487, %v489
      %v494 = vsel %vm492, %v489, %v491
      %497 = vrot.lane.b32.xlu0 %v425, 91
      %v498 = vpop.permute.xlu0 %497
      %499 = vrot.lane.b32.xlu0 %v426, 91
      %v500 = vpop.permute.xlu0 %499
      %501 = vrot.lane.b32.xlu0 %v427, 91
      %v502 = vpop.permute.xlu0 %501
      %vm503 = vcmask 744448
      %v504 = vsel %vm503, %v498, %v500
      %v505 = vsel %vm503, %v500, %v502
      %508 = vrot.lane.b32.xlu0 %v425, 90
      %v509 = vpop.permute.xlu0 %508
      %510 = vrot.lane.b32.xlu0 %v426, 90
      %v511 = vpop.permute.xlu0 %510
      %512 = vrot.lane.b32.xlu0 %v427, 90
      %v513 = vpop.permute.xlu0 %512
      %vm514 = vcmask 736256
      %v515 = vsel %vm514, %v509, %v511
      %v516 = vsel %vm514, %v511, %v513
      %v519 = vld [vmem:[%s3] sm:$0xf]
      %v520 = vld [vmem:[%s4] sm:$0xf]
      %522 = vset.pattern.permute.xlu0 0
      %523 = vperm.xlu0 %522, %v520
      %v524 = vpop.permute.xlu0 %523
      %v528 = vunpack.c.l.s4 1983009808
      %v529 = vunpack.c.0.s8 %v528
      %v530 = vlaneseq
      %v531 = vshrl.u32 %v530, 7
      %v532 = vsub.s32 %v529, %v531
      %v533 = vrot.slane %v519, %v532
      %v534 = vcombine.high %v533, %v533
      %vm536 = vcmask 130048
      %v538 = vsel %vm536, %v534, 0
      %540 = vmatprep.subr.bf16.mxu0 %v426
      %541 = vmatpush1.bf16.msra.mxu0 %v425
      %542 = vmatprep.subr.bf16.mxu0 %v439
      %543 = vmatpush1.bf16.msra.mxu0 %v438
      %544 = vmatprep.subr.bf16.mxu0 %v450
      %545 = vmatpush1.bf16.msra.mxu0 %v449
      %546 = vmatprep.subr.bf16.mxu0 %v461
      %547 = vmatpush1.bf16.msra.mxu0 %v460
      %548 = vmatprep.subr.bf16.mxu0 %v472
      %549 = vmatpush1.bf16.msra.mxu0 %v471
      %550 = vmatprep.subr.bf16.mxu0 %v483
      %551 = vmatpush1.bf16.msra.mxu0 %v482
      %552 = vmatprep.subr.bf16.mxu0 %v494
      %553 = vmatpush1.bf16.msra.mxu0 %v493
      %554 = vmatprep.subr.bf16.mxu0 %v505
      %555 = vmatpush1.bf16.msra.mxu0 %v504
      %556 = vmatprep.subr.bf16.mxu0 %v516
      %557 = vmatpush1.bf16.msra.mxu0 %v515
      %558 = vmatprep.subr.bf16.mxu0 0
      %559 = vmatpush1.bf16.msra.mxu0 0
      %560 = vmatprep.subr.bf16.mxu0 0
      %561 = vmatpush1.bf16.msra.mxu0 0
      %562 = vmatprep.subr.bf16.mxu0 0
      %563 = vmatpush1.bf16.msra.mxu0 0
      %564 = vmatprep.subr.bf16.mxu0 0
      %565 = vmatpush1.bf16.msra.mxu0 0
      %566 = vmatprep.subr.bf16.mxu0 0
      %567 = vmatpush1.bf16.msra.mxu0 0
      %568 = vmatprep.subr.bf16.mxu0 0
      %569 = vmatpush1.bf16.msra.mxu0 0
      %570 = vmatprep.subr.bf16.mxu0 0
      %571 = vmatpush1.bf16.msra.mxu0 0
      %572 = vmatprep.mubr.bf16.mxu0 %v538
      %573 = vmatmul.mubr.bf16.gmra.mrb[0].mxu0 %v533
      %v574 = vpop.f32.mrb[0].mxu0
      %v575 = vadd.f32 %v524, %v574
      %v576 = vpop.f32.mrb[0].mxu0
      %v577 = vadd.f32 %v524, %v576
      %v578 = vpop.f32.mrb[0].mxu0
      %v579 = vpop.f32.mrb[0].mxu0
      %580 = vdwg.mxu0
      %v581 = vld [vmem:[%s5] sm:$0xf]
      %vm582 = vcmp.ge.f32.partialorder %v575, 0.0
      %vm583 = vcmp.ge.f32.partialorder %v577, 0.0
      %585 = vset.pattern.permute.xlu0 0
      %586 = vperm.xlu0 %585, %v581
      %v587 = vpop.permute.xlu0 %586
      %v589 = vmul.f32 %v587, %v575
      %v590 = vmul.f32 %v587, %v577
      %v591 = vsel %vm582, %v575, %v589
      %v592 = vsel %vm583, %v577, %v590
      %v595 = vcombine.low %v591, %v592
      %597 = vst [vmem:[%s287] sm:$0xff] %v595
      %s598 = smul.u32 2, %s22
      %p599 = scmp.lt.s32.totalorder %s21, 1
      %s600 = scalar_select %p599, %s21, 1
      %p601 = scmp.lt.s32.totalorder %s598, 3
      %s602 = scalar_select %p601, %s598, 3
      %s603 = smul.addr %s600, 4
      %s604 = sadd.s32 %s602, %s603
      %s605 = smul.addr %s604, 4
      %s606 = scalar_lea.vmem %s6, %s605
      // Predicated region
      $region45: #{seqconv3x3_pallas.1} parent=43 // pred_check
        %p607 = pneg %p182
      $region46: #{seqconv3x3_pallas.1} parent=43 // pred_check_branch
        %609 = sbr.rel (%p607) target = $region48
      $region47: #{seqconv3x3_pallas.1} parent=43 // pred_region
        %s610 = smul.u32 2, %s22
      $region48: #{seqconv3x3_pallas.1} parent=43 // pred_fallthru
        _
    $region44: #{seqconv3x3_pallas.1} parent=5 // pred_fallthru
      _
    %p611 = scmp.le.s32.totalorder 2, %s12
    // Predicated region
    $region49: #{seqconv3x3_pallas.1} parent=5 // pred_check
      %p612 = pneg %p611
    $region50: #{seqconv3x3_pallas.1} parent=5 // pred_check_branch
      %614 = sbr.rel (%p612) target = $region52
    $region51: #{seqconv3x3_pallas.1} parent=5 // pred_region
      %s615 = ssub.s32 %s12, 2
      // Predicated region
      $region53: #{seqconv3x3_pallas.1} parent=51 // pred_check
        %p616 = pneg %p188
      $region54: #{seqconv3x3_pallas.1} parent=51 // pred_check_branch
        %618 = sbr.rel (%p616) target = $region56
      $region55: #{seqconv3x3_pallas.1} parent=51 // pred_region
        %s619 = smul.u32 2, %s24
        %p620 = scmp.lt.s32.totalorder %s23, 1
        %s621 = scalar_select %p620, %s23, 1
        %p622 = scmp.lt.s32.totalorder %s619, 3
        %s623 = scalar_select %p622, %s619, 3
        %s624 = smul.addr %s621, 4
        %s625 = sadd.s32 %s623, %s624
        %s626 = smul.addr %s625, 4
        %s627 = scalar_lea.vmem %s6, %s626
      $region56: #{seqconv3x3_pallas.1} parent=51 // pred_fallthru
        _
    $region52: #{seqconv3x3_pallas.1} parent=5 // pred_fallthru
      _
  $region6: #{seqconv3x3_pallas.1} parent=0 // loop_footer
    %s16 = sadd.s32 1, %s12
  $region7: #{seqconv3x3_pallas.1} parent=0 // loop_footer_branch
    %11 = sbr.rel target = $region3
  $region8: #{seqconv3x3_pallas.1} parent=0 // loop_exit
    _

</llo_original>
